<compile_context>
chip_gen: v7x
topology: tpu7x:2x2x1
jax: 0.10.0
libtpu: 0.0.40
codegen_flags: <defaults>
</compile_context>

<pallas_src>
import functools

import jax
import jax.numpy as jnp
from jax import lax
from jax.experimental import pallas as pl
from jax.experimental.pallas import tpu as pltpu

_LANES = 128
_SUBLANES = 8
_CHUNK_ROWS = 1024   # per-chunk f32 cast temp: 1024*128*4 B = 512 KiB
_NUM_SPLITS = 2      # leading "parallel" grid axis -> feeds both v7x TensorCores


@functools.lru_cache(maxsize=1)
def _target_block_rows() -> int:
    """Row-block size per generation.

    v7x (64 MiB VMEM, ~3.2 TB/s HBM): a 1 MiB block DMAs in ~0.33 us, i.e.
    comparable to the fixed ~0.35 us grid-step overhead, so it needs 8 MiB
    blocks (16384 rows) to sit at roofline; 2x8 MiB double-buffered is still
    well inside 64 MiB since we never materialize a full-block f32 temp.
    v5e/v6e (128 MiB VMEM, slower HBM): 4 MiB blocks (8192 rows) already give
    ~90-95% of roofline.
    """
    try:
        vmem_cap = int(pltpu.get_tpu_info().vmem_capacity_bytes)
    except Exception:  # CPU interpret / unknown platform: safe default.
        vmem_cap = 128 << 20
    return 16384 if vmem_cap <= (96 << 20) else 8192


def _mean_kernel(x_ref, o_ref, acc_ref, *, block_rows, chunk_rows,
                 blocks_per_split, rows_valid, mask_start):
    """Grid = (split, block).  Each split carries its own (8,128) f32
    accumulator across its block range and writes one scalar partial sum."""
    c = pl.program_id(0)            # split (TensorCore) index
    i = pl.program_id(1)            # block index within this split
    g = c * blocks_per_split + i    # global (unclamped) block index

    @pl.when(i == 0)
    def _():
        acc_ref[...] = jnp.zeros_like(acc_ref)

    n_full = block_rows // chunk_rows
    rem_rows = block_rows - n_full * chunk_rows   # multiple of 8 (or 0)

    def fold(chunk, rows):
        # Fold (rows,128) -> resident (8,128): pure per-vreg VPU adds, no XLU.
        return jnp.sum(chunk.reshape(rows // _SUBLANES, _SUBLANES, _LANES), axis=0)

    def load(off, rows, masked):
        chunk = x_ref[pl.ds(off, rows), :].astype(jnp.float32)
        if masked:
            row_ids = (g * block_rows + off
                       + lax.broadcasted_iota(jnp.int32, chunk.shape, 0))
            chunk = jnp.where(row_ids < rows_valid, chunk, jnp.float32(0.0))
        return chunk

    def accumulate(masked):
        # Chunked cast+fold: keeps the f32 temp at chunk size (512 KiB) so the
        # block size is not limited by a full-block upcast.
        part = jnp.zeros((_SUBLANES, _LANES), jnp.float32)
        if n_full:
            def body(ci, carry):
                off = pl.multiple_of(ci * chunk_rows, chunk_rows)
                return carry + fold(load(off, chunk_rows, masked), chunk_rows)
            part = lax.fori_loop(0, n_full, body, part)
        if rem_rows:
            off = n_full * chunk_rows            # static offset
            part = part + fold(load(off, rem_rows, masked), rem_rows)
        acc_ref[...] += part

    if mask_start is None:
        accumulate(masked=False)
    else:
        # Only edge blocks (partial tail / duplicated overhang block) pay the
        # iota/compare/select cost; interior blocks take the mask-free path.
        is_edge = g >= mask_start

        @pl.when(is_edge)
        def _():
            accumulate(masked=True)

        @pl.when(jnp.logical_not(is_edge))
        def _():
            accumulate(masked=False)

    @pl.when(i == pl.num_programs(1) - 1)
    def _():
        # Single cross-lane/sublane reduce per split, once at the very end.
        o_ref[0, 0] = jnp.sum(acc_ref[...])


def pallas_mean(x: jax.Array, *, block_rows: int | None = None) -> jax.Array:
    """Mean of all elements of x (f32 accumulation) via a Pallas TPU kernel."""
    n = x.size
    flat = jnp.ravel(x)   # free reshape; keep native dtype (cast per-chunk in VMEM)

    # Kernel consumes the largest (8*128)-aligned prefix; the small remainder
    # (< 1152 elements) is summed in plain JAX -> no full-tensor pad pass.
    rows_valid = (n // _LANES // _SUBLANES) * _SUBLANES
    n_kernel = rows_valid * _LANES
    tail_len = n - n_kernel
    inv_n = 1.0 / float(n)

    if rows_valid == 0:
        # Tiny tensor (< 1024 elements): fixed pallas_call cost dominates.
        return jnp.sum(flat.astype(jnp.float32)) * jnp.float32(inv_n)

    target = block_rows if block_rows is not None else _target_block_rows()
    assert target % _SUBLANES == 0

    if rows_valid <= target:
        blk_rows = rows_valid          # single block == full array (no mask)
        num_blocks = 1
        num_splits = 1
    else:
        blk_rows = target
        num_blocks = pl.cdiv(rows_valid, blk_rows)
        num_splits = _NUM_SPLITS if num_blocks >= _NUM_SPLITS else 1

    chunk_rows = min(_CHUNK_ROWS, blk_rows)
    blocks_per_split = pl.cdiv(num_blocks, num_splits)

    has_partial = (rows_valid % blk_rows) != 0
    has_overhang = blocks_per_split * num_splits != num_blocks
    if has_partial:
        mask_start = num_blocks - 1
    elif has_overhang:
        mask_start = num_blocks
    else:
        mask_start = None

    if has_overhang:
        # Odd block count: the last split re-reads the final block once; its
        # rows are fully masked so it contributes exactly zero.
        def in_map(c, i):
            return (jnp.minimum(c * blocks_per_split + i, num_blocks - 1), 0)
    else:
        def in_map(c, i):
            return (c * blocks_per_split + i, 0)

    if tail_len:
        # TODO(synk): the prefix slice may still cost one copy for
        # lane/sublane-unaligned sizes; all common NCHW sizes take the
        # zero-copy reshape branch below.
        x2d = flat[:n_kernel].reshape(rows_valid, _LANES)
    else:
        x2d = flat.reshape(rows_valid, _LANES)

    in_bytes = blk_rows * _LANES * x2d.dtype.itemsize
    vmem_limit = int(max(32 << 20, 2 * in_bytes + (16 << 20)))

    kernel = functools.partial(
        _mean_kernel,
        block_rows=blk_rows,
        chunk_rows=chunk_rows,
        blocks_per_split=blocks_per_split,
        rows_valid=rows_valid,
        mask_start=mask_start,
    )

    partials = pl.pallas_call(
        kernel,
        out_shape=jax.ShapeDtypeStruct((num_splits, 1), jnp.float32),
        grid_spec=pltpu.PrefetchScalarGridSpec(
            num_scalar_prefetch=0,
            grid=(num_splits, blocks_per_split),
            in_specs=[pl.BlockSpec((blk_rows, _LANES), in_map)],
            out_specs=pl.BlockSpec((1, 1), lambda c, i: (c, 0),
                                   memory_space=pltpu.SMEM),
            scratch_shapes=[pltpu.VMEM((_SUBLANES, _LANES), jnp.float32)],
        ),
        compiler_params=pltpu.CompilerParams(
            dimension_semantics=("parallel", "arbitrary"),
            vmem_limit_bytes=vmem_limit,
        ),
    )(x2d)

    total = jnp.sum(partials)
    if tail_len:
        total = total + jnp.sum(flat[n_kernel:].astype(jnp.float32))
    return total * jnp.float32(inv_n)


class IdentityLoss:
    """JAX/Pallas port of the PyTorch `Identity` loss module."""

    def __init__(self, weight=1.0, log_key="identity", **kwargs):
        self.weight = float(weight)
        self.log_key = log_key
        self.pred_key = kwargs["pred_key"]

    def __call__(self, pred, gt=None):
        loss = pallas_mean(pred[self.pred_key])
        loss_dict = {self.log_key: loss}
        return loss * self.weight, loss_dict


if __name__ == "__main__":
    key = jax.random.PRNGKey(0)
    # Small NCHW-style prediction tensor, matching typical conv-output layout.
    x = jax.random.normal(key, (2, 4, 16, 16), dtype=jnp.float32)

    module = IdentityLoss(weight=0.5, log_key="identity", pred_key="x")
    weighted_loss, loss_dict = module({"x": x}, gt=None)

    weighted_loss = jax.block_until_ready(weighted_loss)
    logged = jax.block_until_ready(loss_dict["identity"])

    ref = jnp.mean(x)
    assert jnp.allclose(logged, ref, atol=1e-5, rtol=1e-5), (logged, ref)
    assert jnp.allclose(weighted_loss, ref * 0.5, atol=1e-5, rtol=1e-5)

    # Multi-block + 2-way split + partial last block, native bf16 input
    # (block_rows pinned small so every generation exercises the same path).
    y = jax.random.normal(jax.random.PRNGKey(1), (4, 8, 96, 100), dtype=jnp.bfloat16)
    got = jax.block_until_ready(pallas_mean(y, block_rows=256))
    ref2 = jnp.mean(y.astype(jnp.float32))
    assert jnp.allclose(got, ref2, atol=1e-4, rtol=1e-4), (got, ref2)

    # Odd block count -> overhang path (clamped index_map + fully-masked block).
    w = jax.random.normal(jax.random.PRNGKey(2), (2, 4, 120, 128), dtype=jnp.float32)
    got_w = jax.block_until_ready(pallas_mean(w, block_rows=64))
    ref_w = jnp.mean(w)
    assert jnp.allclose(got_w, ref_w, atol=1e-5, rtol=1e-5), (got_w, ref_w)

    # Lane-unaligned size -> JAX tail path + small single-block kernel.
    z = jax.random.normal(jax.random.PRNGKey(3), (3, 5, 7, 11), dtype=jnp.float32)
    got_z = jax.block_until_ready(pallas_mean(z))
    ref_z = jnp.mean(z)
    assert jnp.allclose(got_z, ref_z, atol=1e-5, rtol=1e-5), (got_z, ref_z)

    # Single block with chunked loop + remainder chunk (no block_rows override).
    v = jax.random.normal(jax.random.PRNGKey(4), (4, 8, 96, 100), dtype=jnp.float32)
    got_v = jax.block_until_ready(pallas_mean(v))
    ref_v = jnp.mean(v)
    assert jnp.allclose(got_v, ref_v, atol=1e-5, rtol=1e-5), (got_v, ref_v)

    print("KERNEL_OK")
</pallas_src>

<mosaic_0001>
module attributes {stable_mosaic.version = 11 : i64} {
  func.func @_mean_kernel(%arg0: i32, %arg1: i32, %arg2: memref<16x128xf32, #tpu.memory_space<vmem>>, %arg3: memref<1x1xf32, #tpu.memory_space<smem>>, %arg4: memref<8x128xf32, #tpu.memory_space<vmem>>) attributes {dimension_semantics = [#tpu.dimension_semantics<parallel>, #tpu.dimension_semantics<arbitrary>], iteration_bounds = array<i64: 1, 1>, scalar_prefetch = 0 : i64, scratch_operands = 1 : i64, tpu.core_type = #tpu.core_type<tc>, window_params = [{transform_indices = @transform_0, window_bounds = array<i64: 16, 128>}, {transform_indices = @transform_1, window_bounds = array<i64: 1, 1>}]} {
    %c0_i32 = arith.constant 0 : i32
    %0 = arith.cmpi eq, %arg1, %c0_i32 : i32
    %1 = arith.extui %0 : i1 to i32
    %c0_i32_0 = arith.constant 0 : i32
    %2 = arith.cmpi ne, %1, %c0_i32_0 : i32
    scf.if %2 {
      %cst_9 = arith.constant 0.000000e+00 : f32
      %17 = vector.broadcast %cst_9 : f32 to vector<8x128xf32>
      %c0_10 = arith.constant 0 : index
      %c0_11 = arith.constant 0 : index
      %18 = vector.load %arg4[%c0_10, %c0_11] : memref<8x128xf32, #tpu.memory_space<vmem>>, vector<8x128xf32>
      tpu.vector_store %arg4[%c0_10, %c0_11], %17 {strides = array<i32>} : memref<8x128xf32, #tpu.memory_space<vmem>>, vector<8x128xf32>,
    } else {
    }
    %cst = arith.constant 0.000000e+00 : f32
    %3 = vector.broadcast %cst : f32 to vector<8x128xf32>
    %c0_i32_1 = arith.constant 0 : i32
    %c16_i32 = arith.constant 16 : i32
    %4 = arith.muli %c0_i32_1, %c16_i32 : i32
    %5 = tpu.assume_multiple %4, 16 : i32
    %6 = arith.index_cast %5 : i32 to index
    %c0 = arith.constant 0 : index
    %7 = vector.load %arg2[%6, %c0] : memref<16x128xf32, #tpu.memory_space<vmem>>, vector<16x128xf32>
    %8 = vector.shape_cast %7 : vector<16x128xf32> to vector<2x8x128xf32>
    %cst_2 = arith.constant dense<0.000000e+00> : vector<8x128xf32>
    %9 = vector.multi_reduction <add>, %8, %cst_2 [0] : vector<2x8x128xf32> to vector<8x128xf32>
    %10 = arith.addf %3, %9 : vector<8x128xf32>
    %c1_i32 = arith.constant 1 : i32
    %c0_3 = arith.constant 0 : index
    %c0_4 = arith.constant 0 : index
    %11 = vector.load %arg4[%c0_3, %c0_4] : memref<8x128xf32, #tpu.memory_space<vmem>>, vector<8x128xf32>
    %12 = arith.addf %11, %10 : vector<8x128xf32>
    %c0_5 = arith.constant 0 : index
    %c0_6 = arith.constant 0 : index
    %13 = vector.load %arg4[%c0_5, %c0_6] : memref<8x128xf32, #tpu.memory_space<vmem>>, vector<8x128xf32>
    tpu.vector_store %arg4[%c0_5, %c0_6], %12 {strides = array<i32>} : memref<8x128xf32, #tpu.memory_space<vmem>>, vector<8x128xf32>,
    %c0_i32_7 = arith.constant 0 : i32
    %14 = arith.cmpi eq, %arg1, %c0_i32_7 : i32
    %15 = arith.extui %14 : i1 to i32
    %c0_i32_8 = arith.constant 0 : i32
    %16 = arith.cmpi ne, %15, %c0_i32_8 : i32
    scf.if %16 {
      %c0_9 = arith.constant 0 : index
      %c0_10 = arith.constant 0 : index
      %17 = vector.load %arg4[%c0_9, %c0_10] : memref<8x128xf32, #tpu.memory_space<vmem>>, vector<8x128xf32>
      %18 = vector.shape_cast %17 : vector<8x128xf32> to vector<1x8x128xf32>
      %cst_11 = arith.constant dense<0.000000e+00> : vector<1xf32>
      %19 = vector.multi_reduction <add>, %18, %cst_11 [1, 2] : vector<1x8x128xf32> to vector<1xf32>
      %20 = vector.shape_cast %19 : vector<1xf32> to vector<1x1x1xf32>
      %21 = vector.extract %20[0, 0, 0] : f32 from vector<1x1x1xf32>
      %c0_12 = arith.constant 0 : index
      %c0_13 = arith.constant 0 : index
      %22 = memref.load %arg3[%c0_12, %c0_13] : memref<1x1xf32, #tpu.memory_space<smem>>
      memref.store %21, %arg3[%c0_12, %c0_13] : memref<1x1xf32, #tpu.memory_space<smem>>
    } else {
    }
    return
  }
  func.func @transform_0(%arg0: i32, %arg1: i32) -> (i32, i32) {
    %c1_i32 = arith.constant 1 : i32
    %0 = arith.muli %arg0, %c1_i32 : i32
    %1 = arith.addi %0, %arg1 : i32
    %c0_i32 = arith.constant 0 : i32
    %c0_i32_0 = arith.constant 0 : i32
    return %1, %c0_i32 : i32, i32
  }
  func.func @transform_1(%arg0: i32, %arg1: i32) -> (i32, i32) {
    %c0_i32 = arith.constant 0 : i32
    %c0_i32_0 = arith.constant 0 : i32
    return %arg0, %c0_i32 : i32, i32
  }
}

</mosaic_0001>

<llo_original>
// kernel: tpu_custom_call.1
$region0: #{tpu_custom_call.1}
  #allocation0 [shape = 'u32[]', space=smem, size = 0x4, offset = 0x4, fixed_abs, tag = 'smem constant byte address 0x4 - core index']
  #allocation1 [shape = 'u32[144,128]{1,0:T(1,128)}', space=vmem, size = 0x12000, scoped, tag = 'internal scratch']
  #allocation2 [shape = 'f32[8,128]{1,0:T(8,128)}', space=vmem, size = 0x1000, scoped, tag = 'scratch operand']
  %s0 = inlined_call_operand.hbm [shape: f32[16,128], index: 0, kind: input, shape index: {}]
  %s1 = inlined_call_operand.hbm [shape: f32[1,1], index: 1, kind: output, shape index: {}]
  %s2 = sld [smem:[#allocation0]]
  $region26: #{tpu_custom_call.1} parent=0
    _
  %s4 = ssub.s32 1, %s2
  %s5 = scalar_select 0, %s4, %s2
  $region1: #{tpu_custom_call.1} parent=0
    #allocation3 [shape = 'u8[8192]{0}', space=vmem, size = 0x2000, scoped, tag = 'input window, operand 0, single buffered']
    #allocation4 [shape = 's32[1]{0}', space=sflag, size = 0x4, scoped, tag = 'scoped memory for tpu_custom_call.1']
    #allocation5 [shape = 's32[1]{0}', space=sflag, size = 0x4, scoped, tag = 'scoped memory for tpu_custom_call.1']
    #allocation6 [shape = 'u8[512]{0}', space=smem, size = 0x200, scoped, tag = 'output window, operand 0, single buffered']
    %6 = vsyncpa [#allocation4], 0
    %7 = vsyncpa [#allocation5], 0
    // Predicated region
    $region2: #{tpu_custom_call.1} parent=1 // pred_check
      _
    $region3: #{tpu_custom_call.1} parent=1 // pred_check_branch
      %9 = sbr.rel (0) target = $region5
    $region4: #{tpu_custom_call.1} parent=1 // pred_region
      %s10 = sadd.s32 0, 0
      %s11 = smul.u32 2, %s10
      %s13 = ssub.s32 256, 256
      %14 = vsyncadd [#allocation4], %s13
      %s15 = smul.addr %s11, 128
      %s16 = scalar_lea.hbm %s0, %s15
      %s17 = sshll.u32 [#allocation3], 4
      %s18 = int_to_ptr.vmem [resolvable:$true] %s17
      %23 = dma.hbm_to_vmem [thread:$0]  %s16, 256, %s18, [#allocation4], 128, 128, 8
    $region5: #{tpu_custom_call.1} parent=1 // pred_fallthru
      _
    // Predicated region
    $region6: #{tpu_custom_call.1} parent=1 // pred_check
      _
    $region7: #{tpu_custom_call.1} parent=1 // pred_check_branch
      %25 = sbr.rel (0) target = $region9
    $region8: #{tpu_custom_call.1} parent=1 // pred_region
      %26 = dma.done [#allocation4], 256
    $region9: #{tpu_custom_call.1} parent=1 // pred_fallthru
      _
    %s27 = sadd.s32 0, 0
    %s28 = smul.u32 2, %s27
    %p29 = scmp.eq.s32.totalorder 0, 0
    // Predicated region
    $region10: #{tpu_custom_call.1} parent=1 // pred_check
      %p30 = pneg %p29
    $region11: #{tpu_custom_call.1} parent=1 // pred_check_branch
      %32 = sbr.rel (%p30) target = $region13
    $region12: #{tpu_custom_call.1} parent=1 // pred_region
      %33 = vst [vmem:[#allocation2] sm:$0xff] 0.0
    $region13: #{tpu_custom_call.1} parent=1 // pred_fallthru
      _
    %v34 = vld [vmem:[#allocation3] sm:$0xff]
    %v35 = vld [vmem:[#allocation3 + $0x8] sm:$0xff]
    %v36 = vadd.f32 %v34, %v35
    %v37 = vadd.f32 %v36, 0.0
    %v38 = vld [vmem:[#allocation2] sm:$0xff]
    %v39 = vadd.f32 %v38, %v37
    %40 = vst [vmem:[#allocation2] sm:$0xff] %v39
    // Predicated region
    $region14: #{tpu_custom_call.1} parent=1 // pred_check
      %p41 = pneg %p29
    $region15: #{tpu_custom_call.1} parent=1 // pred_check_branch
      %43 = sbr.rel (%p41) target = $region17
    $region16: #{tpu_custom_call.1} parent=1 // pred_region
      %v44 = vld [vmem:[#allocation2] sm:$0xff]
      %45 = vadd.xlane.f32.xlu0 %v44
      %v46 = vpop.xlane.xlu0 %45
      %v47 = vrot.slane %v46, 4
      %v48 = vadd.f32 %v46, %v47
      %v49 = vrot.slane %v48, 2
      %v50 = vadd.f32 %v48, %v49
      %v51 = vrot.slane %v50, 1
      %v52 = vadd.f32 %v50, %v51
      %s53 = vtos %v52
      %s54 = scalar_lea.smem [#allocation6], 0
      %55 = sst [smem:[%s54]] %s53
    $region17: #{tpu_custom_call.1} parent=1 // pred_fallthru
      _
    // Predicated region
    $region18: #{tpu_custom_call.1} parent=1 // pred_check
      _
    $region19: #{tpu_custom_call.1} parent=1 // pred_check_branch
      %57 = sbr.rel (0) target = $region21
    $region20: #{tpu_custom_call.1} parent=1 // pred_region
      %s59 = ssub.s32 16, 16
      %60 = vsyncadd [#allocation5], %s59
      %63 = dma.smem_to_hbm [#allocation6], 16, %s1, [#allocation5]
    $region21: #{tpu_custom_call.1} parent=1 // pred_fallthru
      _
    // Predicated region
    $region22: #{tpu_custom_call.1} parent=1 // pred_check
      _
    $region23: #{tpu_custom_call.1} parent=1 // pred_check_branch
      %65 = sbr.rel (0) target = $region25
    $region24: #{tpu_custom_call.1} parent=1 // pred_region
      %66 = dma.done [#allocation5], 16
    $region25: #{tpu_custom_call.1} parent=1 // pred_fallthru
      _
    %67 = sfence
    %68 = vsyncpa [#allocation4], 1
    %69 = vsyncpa [#allocation5], 1

</llo_original>
